<compile_context>
chip_gen: v5e
topology: v5e:2x2
jax: 0.10.0
libtpu: 0.0.40
codegen_flags: <defaults>
</compile_context>

<pallas_src>
import math

import jax
import jax.numpy as jnp
import numpy as np
from jax.experimental import pallas as pl
from jax.experimental.pallas import tpu as pltpu


def library_size(n, poly_order, use_sine=False, include_constant=True):
    l = 0
    for k in range(poly_order + 1):
        l += math.comb(n + k - 1, k)
    if use_sine:
        l += n
    if not include_constant:
        l -= 1
    return l


def sindy_library(x, poly_order, include_constant=True, include_sine=False):
    """Standard SINDy library along the last axis of x (shape (..., z_dim))."""
    n = x.shape[-1]
    terms = []
    if include_constant:
        terms.append(jnp.ones(x.shape[:-1] + (1,), dtype=x.dtype))
    for i in range(n):
        terms.append(x[..., i:i + 1])
    if poly_order > 1:
        for i in range(n):
            for j in range(i, n):
                terms.append((x[..., i] * x[..., j])[..., None])
    if poly_order > 2:
        for i in range(n):
            for j in range(i, n):
                for k in range(j, n):
                    terms.append((x[..., i] * x[..., j] * x[..., k])[..., None])
    if poly_order > 3:
        for i in range(n):
            for j in range(i, n):
                for k in range(j, n):
                    for p in range(k, n):
                        terms.append(
                            (x[..., i] * x[..., j] * x[..., k] * x[..., p])[..., None])
    if poly_order > 4:
        for i in range(n):
            for j in range(i, n):
                for k in range(j, n):
                    for p in range(k, n):
                        for q in range(p, n):
                            terms.append(
                                (x[..., i] * x[..., j] * x[..., k]
                                 * x[..., p] * x[..., q])[..., None])
    if include_sine:
        terms.append(jnp.sin(x))
    return jnp.concatenate(terms, axis=-1)


def _esindy_dx_kernel(lib_ref, coef_ref, dx_ref):
    """dx[e] = lib[e] @ coef[e] for every ensemble member, one kernel call.

    lib_ref : (E, TILE_B, L)  SINDy library tile, ensemble-major.
    coef_ref: (E, L, Z)       masked SINDy coefficients (VMEM-resident across
                              the whole batch grid; constant index_map).
    dx_ref  : (E, TILE_B, Z)  output derivatives.
    """
    num_ensemble = lib_ref.shape[0]
    for e in range(num_ensemble):                       # static unroll; E is small
        dx_ref[e] = jnp.dot(
            lib_ref[e], coef_ref[e],
            preferred_element_type=jnp.float32).astype(dx_ref.dtype)


def esindy_forward(x, sindy_coefs, threshold_mask, poly_order,
                   include_constant=True, include_sine=False,
                   tile_b=512, mxu_input_dtype=None):
    """Pallas ESINDy forward.

    x:                          (batch, num_ensemble, z_dim)       float
    sindy_coefs/threshold_mask: (num_ensemble, library_dim, z_dim) float
    Returns (dx, masked_coefs); dx has shape (batch, num_ensemble, z_dim),
    masked_coefs has shape (num_ensemble, library_dim, z_dim).
    """
    x = x.astype(jnp.float32)
    B, E, Z = x.shape
    Ec, L, Zc = sindy_coefs.shape
    assert Ec == E and Zc == Z

    # Masked coefficients in plain JAX (cheap elementwise, fused by XLA).
    coeffs = (sindy_coefs.astype(jnp.float32)
              * threshold_mask.astype(jnp.float32))                   # (E, L, Z)

    # Ensemble-major x (tiny transpose), then build the library in JAX so the
    # (E, B, L) array lands directly in the kernel's layout — no padded copy.
    x_em = jnp.transpose(x, (1, 0, 2))                                # (E, B, Z)
    lib = sindy_library(x_em, poly_order, include_constant, include_sine)  # (E,B,L)
    assert lib.shape[-1] == L

    # Optional low-precision MXU inputs (v6e/v7x); accumulation stays f32.
    if mxu_input_dtype is not None:
        lib_in = lib.astype(mxu_input_dtype)
        coef_in = coeffs.astype(mxu_input_dtype)
    else:
        lib_in = lib
        coef_in = coeffs

    tile_b = min(tile_b, B)
    grid = (pl.cdiv(B, tile_b),)

    dx_em = pl.pallas_call(
        _esindy_dx_kernel,
        out_shape=jax.ShapeDtypeStruct((E, B, Z), jnp.float32),
        grid_spec=pltpu.PrefetchScalarGridSpec(
            num_scalar_prefetch=0,
            grid=grid,
            in_specs=[
                # Library: batch-tiled; trailing dims (tile_b, L) are
                # (multiple-of-8-or-full, full) so no host-side padding needed.
                pl.BlockSpec((E, tile_b, L), lambda i: (0, i, 0)),
                # Coefficients: constant block index -> resident in VMEM.
                pl.BlockSpec((E, L, Z), lambda i: (0, 0, 0)),
            ],
            out_specs=pl.BlockSpec((E, tile_b, Z), lambda i: (0, i, 0)),
        ),
        compiler_params=pltpu.CompilerParams(
            dimension_semantics=("parallel",)),
    )(lib_in, coef_in)

    dx = jnp.transpose(dx_em, (1, 0, 2))                              # (B, E, Z)
    return dx, coeffs


if __name__ == "__main__":
    # Small config consistent with the module (args / hyperparams).
    z_dim = 3
    poly_order = 2
    include_constant = True
    include_sine = True
    num_ensemble = 4
    batch = 8

    L = library_size(z_dim, poly_order, use_sine=include_sine,
                     include_constant=include_constant)

    # Parameters exactly as in Net.__init__: all-ones coefficients and mask.
    sindy_coefs = jnp.ones((num_ensemble, L, z_dim), jnp.float32)
    threshold_mask = jnp.ones((num_ensemble, L, z_dim), jnp.float32)

    key = jax.random.PRNGKey(0)
    x = jax.random.normal(key, (batch, num_ensemble, z_dim), dtype=jnp.float32)

    dx, coeffs = esindy_forward(x, sindy_coefs, threshold_mask, poly_order,
                                include_constant, include_sine)
    dx = jax.block_until_ready(dx)
    coeffs = jax.block_until_ready(coeffs)

    # Pure-JAX reference (mirrors torch.matmul(library.unsqueeze(2), coefs).squeeze(2)).
    lib_ref = sindy_library(x, poly_order, include_constant, include_sine)
    coeffs_ref = sindy_coefs * threshold_mask
    dx_ref = jnp.einsum("bel,eld->bed", lib_ref, coeffs_ref)

    assert dx.shape == (batch, num_ensemble, z_dim)
    assert coeffs.shape == (num_ensemble, L, z_dim)
    np.testing.assert_allclose(np.asarray(dx), np.asarray(dx_ref),
                               rtol=1e-5, atol=1e-5)
    np.testing.assert_allclose(np.asarray(coeffs), np.asarray(coeffs_ref),
                               rtol=1e-6, atol=1e-6)
    print("KERNEL_OK")
</pallas_src>

<mosaic_0001>
module attributes {stable_mosaic.version = 11 : i64} {
  func.func @_esindy_dx_kernel(%arg0: i32, %arg1: memref<4x8x13xf32, #tpu.memory_space<vmem>>, %arg2: memref<4x13x3xf32, #tpu.memory_space<vmem>>, %arg3: memref<4x8x3xf32, #tpu.memory_space<vmem>>) attributes {dimension_semantics = [#tpu.dimension_semantics<parallel>], iteration_bounds = array<i64: 1>, scalar_prefetch = 0 : i64, scratch_operands = 0 : i64, tpu.core_type = #tpu.core_type<tc>, window_params = [{transform_indices = @transform_0, window_bounds = array<i64: 4, 8, 13>}, {pipeline_mode = #tpu.pipeline_mode<synchronous>, transform_indices = @transform_1, window_bounds = array<i64: 4, 13, 3>}, {transform_indices = @transform_2, window_bounds = array<i64: 4, 8, 3>}]} {
    %c0 = arith.constant 0 : index
    %c0_0 = arith.constant 0 : index
    %c0_1 = arith.constant 0 : index
    %0 = vector.load %arg1[%c0, %c0_0, %c0_1] : memref<4x8x13xf32, #tpu.memory_space<vmem>>, vector<1x8x13xf32>
    %1 = vector.shape_cast %0 : vector<1x8x13xf32> to vector<8x13xf32>
    %c0_2 = arith.constant 0 : index
    %c0_3 = arith.constant 0 : index
    %c0_4 = arith.constant 0 : index
    %2 = vector.load %arg2[%c0_2, %c0_3, %c0_4] : memref<4x13x3xf32, #tpu.memory_space<vmem>>, vector<1x13x3xf32>
    %3 = vector.shape_cast %2 : vector<1x13x3xf32> to vector<13x3xf32>
    %cst = arith.constant dense<0.000000e+00> : vector<8x3xf32>
    %4 = tpu.matmul %1, %3, %cst {dimension_numbers = #tpu.dot_dimension_numbers<[1], [0], [0], [1], [0, 0, 1, 1], [], []>} : vector<8x13xf32>, vector<13x3xf32>, vector<8x3xf32> -> vector<8x3xf32>
    %c0_5 = arith.constant 0 : index
    %c0_6 = arith.constant 0 : index
    %c0_7 = arith.constant 0 : index
    %5 = vector.load %arg3[%c0_5, %c0_6, %c0_7] : memref<4x8x3xf32, #tpu.memory_space<vmem>>, vector<1x8x3xf32>
    %6 = vector.shape_cast %5 : vector<1x8x3xf32> to vector<8x3xf32>
    %7 = vector.shape_cast %4 : vector<8x3xf32> to vector<1x8x3xf32>
    tpu.vector_store %arg3[%c0_5, %c0_6, %c0_7], %7 {strides = array<i32>} : memref<4x8x3xf32, #tpu.memory_space<vmem>>, vector<1x8x3xf32>,
    %c1 = arith.constant 1 : index
    %c0_8 = arith.constant 0 : index
    %c0_9 = arith.constant 0 : index
    %8 = vector.load %arg1[%c1, %c0_8, %c0_9] : memref<4x8x13xf32, #tpu.memory_space<vmem>>, vector<1x8x13xf32>
    %9 = vector.shape_cast %8 : vector<1x8x13xf32> to vector<8x13xf32>
    %c1_10 = arith.constant 1 : index
    %c0_11 = arith.constant 0 : index
    %c0_12 = arith.constant 0 : index
    %10 = vector.load %arg2[%c1_10, %c0_11, %c0_12] : memref<4x13x3xf32, #tpu.memory_space<vmem>>, vector<1x13x3xf32>
    %11 = vector.shape_cast %10 : vector<1x13x3xf32> to vector<13x3xf32>
    %cst_13 = arith.constant dense<0.000000e+00> : vector<8x3xf32>
    %12 = tpu.matmul %9, %11, %cst_13 {dimension_numbers = #tpu.dot_dimension_numbers<[1], [0], [0], [1], [0, 0, 1, 1], [], []>} : vector<8x13xf32>, vector<13x3xf32>, vector<8x3xf32> -> vector<8x3xf32>
    %c1_14 = arith.constant 1 : index
    %c0_15 = arith.constant 0 : index
    %c0_16 = arith.constant 0 : index
    %13 = vector.load %arg3[%c1_14, %c0_15, %c0_16] : memref<4x8x3xf32, #tpu.memory_space<vmem>>, vector<1x8x3xf32>
    %14 = vector.shape_cast %13 : vector<1x8x3xf32> to vector<8x3xf32>
    %15 = vector.shape_cast %12 : vector<8x3xf32> to vector<1x8x3xf32>
    tpu.vector_store %arg3[%c1_14, %c0_15, %c0_16], %15 {strides = array<i32>} : memref<4x8x3xf32, #tpu.memory_space<vmem>>, vector<1x8x3xf32>,
    %c2 = arith.constant 2 : index
    %c0_17 = arith.constant 0 : index
    %c0_18 = arith.constant 0 : index
    %16 = vector.load %arg1[%c2, %c0_17, %c0_18] : memref<4x8x13xf32, #tpu.memory_space<vmem>>, vector<1x8x13xf32>
    %17 = vector.shape_cast %16 : vector<1x8x13xf32> to vector<8x13xf32>
    %c2_19 = arith.constant 2 : index
    %c0_20 = arith.constant 0 : index
    %c0_21 = arith.constant 0 : index
    %18 = vector.load %arg2[%c2_19, %c0_20, %c0_21] : memref<4x13x3xf32, #tpu.memory_space<vmem>>, vector<1x13x3xf32>
    %19 = vector.shape_cast %18 : vector<1x13x3xf32> to vector<13x3xf32>
    %cst_22 = arith.constant dense<0.000000e+00> : vector<8x3xf32>
    %20 = tpu.matmul %17, %19, %cst_22 {dimension_numbers = #tpu.dot_dimension_numbers<[1], [0], [0], [1], [0, 0, 1, 1], [], []>} : vector<8x13xf32>, vector<13x3xf32>, vector<8x3xf32> -> vector<8x3xf32>
    %c2_23 = arith.constant 2 : index
    %c0_24 = arith.constant 0 : index
    %c0_25 = arith.constant 0 : index
    %21 = vector.load %arg3[%c2_23, %c0_24, %c0_25] : memref<4x8x3xf32, #tpu.memory_space<vmem>>, vector<1x8x3xf32>
    %22 = vector.shape_cast %21 : vector<1x8x3xf32> to vector<8x3xf32>
    %23 = vector.shape_cast %20 : vector<8x3xf32> to vector<1x8x3xf32>
    tpu.vector_store %arg3[%c2_23, %c0_24, %c0_25], %23 {strides = array<i32>} : memref<4x8x3xf32, #tpu.memory_space<vmem>>, vector<1x8x3xf32>,
    %c3 = arith.constant 3 : index
    %c0_26 = arith.constant 0 : index
    %c0_27 = arith.constant 0 : index
    %24 = vector.load %arg1[%c3, %c0_26, %c0_27] : memref<4x8x13xf32, #tpu.memory_space<vmem>>, vector<1x8x13xf32>
    %25 = vector.shape_cast %24 : vector<1x8x13xf32> to vector<8x13xf32>
    %c3_28 = arith.constant 3 : index
    %c0_29 = arith.constant 0 : index
    %c0_30 = arith.constant 0 : index
    %26 = vector.load %arg2[%c3_28, %c0_29, %c0_30] : memref<4x13x3xf32, #tpu.memory_space<vmem>>, vector<1x13x3xf32>
    %27 = vector.shape_cast %26 : vector<1x13x3xf32> to vector<13x3xf32>
    %cst_31 = arith.constant dense<0.000000e+00> : vector<8x3xf32>
    %28 = tpu.matmul %25, %27, %cst_31 {dimension_numbers = #tpu.dot_dimension_numbers<[1], [0], [0], [1], [0, 0, 1, 1], [], []>} : vector<8x13xf32>, vector<13x3xf32>, vector<8x3xf32> -> vector<8x3xf32>
    %c3_32 = arith.constant 3 : index
    %c0_33 = arith.constant 0 : index
    %c0_34 = arith.constant 0 : index
    %29 = vector.load %arg3[%c3_32, %c0_33, %c0_34] : memref<4x8x3xf32, #tpu.memory_space<vmem>>, vector<1x8x3xf32>
    %30 = vector.shape_cast %29 : vector<1x8x3xf32> to vector<8x3xf32>
    %31 = vector.shape_cast %28 : vector<8x3xf32> to vector<1x8x3xf32>
    tpu.vector_store %arg3[%c3_32, %c0_33, %c0_34], %31 {strides = array<i32>} : memref<4x8x3xf32, #tpu.memory_space<vmem>>, vector<1x8x3xf32>,
    return
  }
  func.func @transform_0(%arg0: i32) -> (i32, i32, i32) {
    %c0_i32 = arith.constant 0 : i32
    %c0_i32_0 = arith.constant 0 : i32
    %c0_i32_1 = arith.constant 0 : i32
    return %c0_i32, %arg0, %c0_i32_0 : i32, i32, i32
  }
  func.func @transform_1(%arg0: i32) -> (i32, i32, i32) {
    %c0_i32 = arith.constant 0 : i32
    %c0_i32_0 = arith.constant 0 : i32
    %c0_i32_1 = arith.constant 0 : i32
    %c0_i32_2 = arith.constant 0 : i32
    return %c0_i32, %c0_i32_0, %c0_i32_1 : i32, i32, i32
  }
  func.func @transform_2(%arg0: i32) -> (i32, i32, i32) {
    %c0_i32 = arith.constant 0 : i32
    %c0_i32_0 = arith.constant 0 : i32
    %c0_i32_1 = arith.constant 0 : i32
    return %c0_i32, %arg0, %c0_i32_0 : i32, i32, i32
  }
}

</mosaic_0001>

<llo_original>
// kernel: tpu_custom_call.1
$region0: #{tpu_custom_call.1}
  #allocation0 [shape = 'u32[]', space=smem, size = 0x4, offset = 0x4, fixed_abs, tag = 'smem constant byte address 0x4 - core index']
  #allocation1 [shape = 'u32[72,128]{1,0:T(1,128)}', space=vmem, size = 0x9000, scoped, tag = 'internal scratch']
  %s0 = inlined_call_operand.vmem [shape: f32[4,8,13], index: 0, kind: input, shape index: {}]
  %s1 = inlined_call_operand.vmem [shape: f32[4,13,3], index: 1, kind: input, shape index: {}]
  %s2 = inlined_call_operand.vmem [shape: f32[4,8,3], index: 2, kind: output, shape index: {}]
  %s3 = sld [smem:[#allocation0]]
  $region18: #{tpu_custom_call.1} parent=0
    _
  %s5 = ssub.s32 1, %s3
  %s6 = scalar_select 0, %s5, %s3
  // Predicated region
  $region2: #{tpu_custom_call.1} parent=0 // pred_check
    _
  $region3: #{tpu_custom_call.1} parent=0 // pred_check_branch
    %8 = sbr.rel (0) target = $region5
  $region4: #{tpu_custom_call.1} parent=0 // pred_region
    _
  $region5: #{tpu_custom_call.1} parent=0 // pred_fallthru
    _
  // Predicated region
  $region6: #{tpu_custom_call.1} parent=0 // pred_check
    _
  $region7: #{tpu_custom_call.1} parent=0 // pred_check_branch
    %10 = sbr.rel (0) target = $region9
  $region8: #{tpu_custom_call.1} parent=0 // pred_region
    _
  $region9: #{tpu_custom_call.1} parent=0 // pred_fallthru
    _
  %v11 = vld [vmem:[%s0] sm:$0xff]
  %v12 = vld [vmem:[%s1] sm:$0xff]
  %v13 = vld [vmem:[%s1 + $0x8] sm:$0x1f]
  %vm14 = vcmask 105472
  %v16 = vsel %vm14, %v11, 0
  %vm18 = vcmask 1044480
  %v20 = vsel %vm18, %v13, 0
  %22 = vmatpush.msra.mxu0 0.0
  %23 = vmatpush.msra.mxu0 0.0
  %24 = vmatpush.msra.mxu0 0.0
  %25 = vmatpush.msra.mxu0 0.0
  %26 = vmatpush.msra.mxu0 0.0
  %27 = vmatpush.msra.mxu0 0.0
  %28 = vmatpush.msra.mxu0 0.0
  %29 = vmatpush.msra.mxu0 0.0
  %30 = vmatpush.msra.mxu0 0.0
  %31 = vmatpush.msra.mxu0 0.0
  %32 = vmatpush.msra.mxu0 0.0
  %33 = vmatpush.msra.mxu0 0.0
  %34 = vmatpush.msra.mxu0 0.0
  %35 = vmatpush.msra.mxu0 0.0
  %36 = vmatpush.msra.mxu0 %v20
  %37 = vmatpush.msra.mxu0 %v12
  %38 = vmatmul.f32.gmra.mxu0 %v16
  %v39 = vpop.f32.mrf.mxu0
  %v40 = vadd.f32 0.0, %v39
  %41 = vdwg.mxu0
  %vm42 = vcmask 23552
  %43 = vst.msk [vmem:[%s2] sm:$0xff] %vm42, %v40
  %s44 = scalar_lea.vmem %s0, 8
  %v45 = vld [vmem:[%s44] sm:$0xff]
  %s46 = scalar_lea.vmem %s1, 16
  %v47 = vld [vmem:[%s46] sm:$0xff]
  %v48 = vld [vmem:[%s46 + $0x8] sm:$0x1f]
  %v50 = vsel %vm14, %v45, 0
  %v53 = vsel %vm18, %v48, 0
  %55 = vmatpush.msra.mxu0 0.0
  %56 = vmatpush.msra.mxu0 0.0
  %57 = vmatpush.msra.mxu0 0.0
  %58 = vmatpush.msra.mxu0 0.0
  %59 = vmatpush.msra.mxu0 0.0
  %60 = vmatpush.msra.mxu0 0.0
  %61 = vmatpush.msra.mxu0 0.0
  %62 = vmatpush.msra.mxu0 0.0
  %63 = vmatpush.msra.mxu0 0.0
  %64 = vmatpush.msra.mxu0 0.0
  %65 = vmatpush.msra.mxu0 0.0
  %66 = vmatpush.msra.mxu0 0.0
  %67 = vmatpush.msra.mxu0 0.0
  %68 = vmatpush.msra.mxu0 0.0
  %69 = vmatpush.msra.mxu0 %v53
  %70 = vmatpush.msra.mxu0 %v47
  %71 = vmatmul.f32.gmra.mxu0 %v50
  %v72 = vpop.f32.mrf.mxu0
  %v73 = vadd.f32 0.0, %v72
  %74 = vdwg.mxu0
  %s75 = scalar_lea.vmem %s2, 8
  %76 = vst.msk [vmem:[%s75] sm:$0xff] %vm42, %v73
  %s77 = scalar_lea.vmem %s0, 16
  %v78 = vld [vmem:[%s77] sm:$0xff]
  %s79 = scalar_lea.vmem %s1, 32
  %v80 = vld [vmem:[%s79] sm:$0xff]
  %v81 = vld [vmem:[%s79 + $0x8] sm:$0x1f]
  %v83 = vsel %vm14, %v78, 0
  %v86 = vsel %vm18, %v81, 0
  %88 = vmatpush.msra.mxu0 0.0
  %89 = vmatpush.msra.mxu0 0.0
  %90 = vmatpush.msra.mxu0 0.0
  %91 = vmatpush.msra.mxu0 0.0
  %92 = vmatpush.msra.mxu0 0.0
  %93 = vmatpush.msra.mxu0 0.0
  %94 = vmatpush.msra.mxu0 0.0
  %95 = vmatpush.msra.mxu0 0.0
  %96 = vmatpush.msra.mxu0 0.0
  %97 = vmatpush.msra.mxu0 0.0
  %98 = vmatpush.msra.mxu0 0.0
  %99 = vmatpush.msra.mxu0 0.0
  %100 = vmatpush.msra.mxu0 0.0
  %101 = vmatpush.msra.mxu0 0.0
  %102 = vmatpush.msra.mxu0 %v86
  %103 = vmatpush.msra.mxu0 %v80
  %104 = vmatmul.f32.gmra.mxu0 %v83
  %v105 = vpop.f32.mrf.mxu0
  %v106 = vadd.f32 0.0, %v105
  %107 = vdwg.mxu0
  %s108 = scalar_lea.vmem %s2, 16
  %109 = vst.msk [vmem:[%s108] sm:$0xff] %vm42, %v106
  %s110 = scalar_lea.vmem %s0, 24
  %v111 = vld [vmem:[%s110] sm:$0xff]
  %s112 = scalar_lea.vmem %s1, 48
  %v113 = vld [vmem:[%s112] sm:$0xff]
  %v114 = vld [vmem:[%s112 + $0x8] sm:$0x1f]
  %v116 = vsel %vm14, %v111, 0
  %v119 = vsel %vm18, %v114, 0
  %121 = vmatpush.msra.mxu0 0.0
  %122 = vmatpush.msra.mxu0 0.0
  %123 = vmatpush.msra.mxu0 0.0
  %124 = vmatpush.msra.mxu0 0.0
  %125 = vmatpush.msra.mxu0 0.0
  %126 = vmatpush.msra.mxu0 0.0
  %127 = vmatpush.msra.mxu0 0.0
  %128 = vmatpush.msra.mxu0 0.0
  %129 = vmatpush.msra.mxu0 0.0
  %130 = vmatpush.msra.mxu0 0.0
  %131 = vmatpush.msra.mxu0 0.0
  %132 = vmatpush.msra.mxu0 0.0
  %133 = vmatpush.msra.mxu0 0.0
  %134 = vmatpush.msra.mxu0 0.0
  %135 = vmatpush.msra.mxu0 %v119
  %136 = vmatpush.msra.mxu0 %v113
  %137 = vmatmul.f32.gmra.mxu0 %v116
  %v138 = vpop.f32.mrf.mxu0
  %v139 = vadd.f32 0.0, %v138
  %140 = vdwg.mxu0
  %s141 = scalar_lea.vmem %s2, 24
  %142 = vst.msk [vmem:[%s141] sm:$0xff] %vm42, %v139
  // Predicated region
  $region10: #{tpu_custom_call.1} parent=0 // pred_check
    _
  $region11: #{tpu_custom_call.1} parent=0 // pred_check_branch
    %144 = sbr.rel (0) target = $region13
  $region12: #{tpu_custom_call.1} parent=0 // pred_region
    _
  $region13: #{tpu_custom_call.1} parent=0 // pred_fallthru
    _
  // Predicated region
  $region14: #{tpu_custom_call.1} parent=0 // pred_check
    _
  $region15: #{tpu_custom_call.1} parent=0 // pred_check_branch
    %146 = sbr.rel (0) target = $region17
  $region16: #{tpu_custom_call.1} parent=0 // pred_region
    _
  $region17: #{tpu_custom_call.1} parent=0 // pred_fallthru
    _

</llo_original>
